<compile_context>
chip_gen: v5e
topology: v5e:2x2
jax: 0.10.0
libtpu: 0.0.40
codegen_flags: <defaults>
</compile_context>

<pallas_src>
import jax
import jax.numpy as jnp
from jax.experimental import pallas as pl
from jax.experimental.pallas import tpu as pltpu


def critic_kernel(xT_ref, w1_ref, w2_ref, w3_ref, o_ref):
    # xT_ref: (S, tb)   w1_ref: (32, S)   w2_ref: (64, 32)   w3_ref: (64, 1)
    # o_ref : (1, tb)
    xT = xT_ref[...].astype(jnp.bfloat16)
    w1 = w1_ref[...].astype(jnp.bfloat16)
    w2 = w2_ref[...].astype(jnp.bfloat16)

    # h1 = sigmoid(W1 @ xT)            -> (32, tb), f32 accumulation on the MXU
    h1 = jax.nn.sigmoid(jnp.dot(w1, xT, preferred_element_type=jnp.float32))
    # h2 = sigmoid(W2 @ h1)            -> (64, tb)
    h2 = jax.nn.sigmoid(
        jnp.dot(w2, h1.astype(jnp.bfloat16),
                preferred_element_type=jnp.float32))
    # out = W3 @ h2 done as VPU multiply + sublane reduce (N=1 matmul wastes
    # an entire MXU tile and pays full push/drain latency).
    o_ref[...] = jnp.sum(w3_ref[...] * h2, axis=0, keepdims=True)  # (1, tb)


def critic_forward(x, w1, w2, w3, *, batch_tile=None):
    """Forward pass of Critic.

    x : (B, state_dim) f32
    w1: (32, state_dim), w2: (64, 32), w3: (1, 64)  -- PyTorch (out, in) layout
    returns (B, 1) f32
    """
    B, S = x.shape
    assert w1.shape == (32, S)
    assert w2.shape == (64, 32)
    assert w3.shape == (1, 64)

    if batch_tile is None:
        # Lane-dense tiles (multiple of 128). 512 rows for big batches keeps
        # >=2 grid steps (v7x megacore) while staying far under the 64 MiB
        # v7x VMEM budget; 128 for small batches.
        batch_tile = 128 if B <= 512 else 512
    tb = int(batch_tile)
    assert tb % 128 == 0, "batch_tile must be a multiple of 128 (lane-dense)"

    # Pad batch up to a tile multiple so every tile is fully lane-dense.
    n_tiles = pl.cdiv(B, tb)
    Bp = n_tiles * tb

    xT = x.T  # (S, B) -- batch on lanes
    if Bp != B:
        xT = jnp.pad(xT, ((0, 0), (0, Bp - B)))
    w3c = w3.reshape(64, 1)  # column vector for the broadcast-multiply

    out_t = pl.pallas_call(
        critic_kernel,
        out_shape=jax.ShapeDtypeStruct((1, Bp), jnp.float32),
        grid_spec=pltpu.PrefetchScalarGridSpec(
            num_scalar_prefetch=0,
            grid=(n_tiles,),
            in_specs=[
                pl.BlockSpec((S, tb), lambda i: (0, i)),    # xT tile
                pl.BlockSpec((32, S), lambda i: (0, 0)),    # W1 (resident)
                pl.BlockSpec((64, 32), lambda i: (0, 0)),   # W2 (resident)
                pl.BlockSpec((64, 1), lambda i: (0, 0)),    # W3 (resident)
            ],
            out_specs=pl.BlockSpec((1, tb), lambda i: (0, i)),
        ),
        compiler_params=pltpu.CompilerParams(
            dimension_semantics=("parallel",),
            vmem_limit_bytes=32 * 1024 * 1024,
        ),
    )(xT, w1, w2, w3c)

    # (1, Bp) -> drop padding -> (B, 1)
    return out_t[:, :B].reshape(B, 1)


def fanin_init(key, shape, fanin=None):
    # Mirrors the PyTorch fanin_init: uniform(-1/sqrt(fanin), 1/sqrt(fanin)),
    # where fanin defaults to shape[0] of the (out, in) weight matrix.
    fanin = fanin or shape[0]
    v = 1.0 / jnp.sqrt(jnp.float32(fanin))
    return jax.random.uniform(key, shape, jnp.float32, minval=-v, maxval=v)


if __name__ == "__main__":
    key = jax.random.PRNGKey(0)
    k_x, k1, k2, k3 = jax.random.split(key, 4)

    batch = 8
    state_dim = 16

    # PyTorch weight layout: (out_features, in_features)
    w1 = fanin_init(k1, (32, state_dim))   # hidden1.weight
    w2 = fanin_init(k2, (64, 32))          # hidden2.weight
    w3 = fanin_init(k3, (1, 64))           # output.weight

    x = jax.random.normal(k_x, (batch, state_dim), jnp.float32)

    out = critic_forward(x, w1, w2, w3)
    out = jax.block_until_ready(out)

    # Pure-JAX f32 reference (kernel uses bf16 matmul operands with f32
    # accumulation, so tolerance is relaxed accordingly).
    ref = jax.nn.sigmoid(x @ w1.T)
    ref = jax.nn.sigmoid(ref @ w2.T)
    ref = ref @ w3.T
    assert out.shape == (batch, 1)
    assert jnp.allclose(out, ref, atol=5e-2, rtol=5e-2), (
        f"max abs err {jnp.max(jnp.abs(out - ref))}")

    print("KERNEL_OK")
</pallas_src>

<mosaic_0001>
module attributes {stable_mosaic.version = 11 : i64} {
  func.func @critic_kernel(%arg0: i32, %arg1: memref<16x128xf32, #tpu.memory_space<vmem>>, %arg2: memref<32x16xf32, #tpu.memory_space<vmem>>, %arg3: memref<64x32xf32, #tpu.memory_space<vmem>>, %arg4: memref<64x1xf32, #tpu.memory_space<vmem>>, %arg5: memref<1x128xf32, #tpu.memory_space<vmem>>) attributes {dimension_semantics = [#tpu.dimension_semantics<parallel>], iteration_bounds = array<i64: 1>, scalar_prefetch = 0 : i64, scratch_operands = 0 : i64, tpu.core_type = #tpu.core_type<tc>, window_params = [{transform_indices = @transform_0, window_bounds = array<i64: 16, 128>}, {pipeline_mode = #tpu.pipeline_mode<synchronous>, transform_indices = @transform_1, window_bounds = array<i64: 32, 16>}, {pipeline_mode = #tpu.pipeline_mode<synchronous>, transform_indices = @transform_2, window_bounds = array<i64: 64, 32>}, {pipeline_mode = #tpu.pipeline_mode<synchronous>, transform_indices = @transform_3, window_bounds = array<i64: 64, 1>}, {transform_indices = @transform_4, window_bounds = array<i64: 1, 128>}]} {
    %c0 = arith.constant 0 : index
    %c0_0 = arith.constant 0 : index
    %0 = vector.load %arg1[%c0, %c0_0] : memref<16x128xf32, #tpu.memory_space<vmem>>, vector<16x128xf32>
    %1 = arith.truncf %0 : vector<16x128xf32> to vector<16x128xbf16>
    %c0_1 = arith.constant 0 : index
    %c0_2 = arith.constant 0 : index
    %2 = vector.load %arg2[%c0_1, %c0_2] : memref<32x16xf32, #tpu.memory_space<vmem>>, vector<32x16xf32>
    %3 = arith.truncf %2 : vector<32x16xf32> to vector<32x16xbf16>
    %c0_3 = arith.constant 0 : index
    %c0_4 = arith.constant 0 : index
    %4 = vector.load %arg3[%c0_3, %c0_4] : memref<64x32xf32, #tpu.memory_space<vmem>>, vector<64x32xf32>
    %5 = arith.truncf %4 : vector<64x32xf32> to vector<64x32xbf16>
    %cst = arith.constant dense<0.000000e+00> : vector<32x128xf32>
    %6 = tpu.matmul %3, %1, %cst {dimension_numbers = #tpu.dot_dimension_numbers<[1], [0], [0], [1], [0, 0, 1, 1], [], []>} : vector<32x16xbf16>, vector<16x128xbf16>, vector<32x128xf32> -> vector<32x128xf32>
    %7 = arith.negf %6 : vector<32x128xf32>
    %8 = math.exp %7 : vector<32x128xf32>
    %cst_5 = arith.constant 1.000000e+00 : f32
    %9 = vector.broadcast %cst_5 : f32 to vector<32x128xf32>
    %10 = arith.addf %9, %8 : vector<32x128xf32>
    %11 = arith.divf %9, %10 : vector<32x128xf32>
    %12 = arith.truncf %11 : vector<32x128xf32> to vector<32x128xbf16>
    %cst_6 = arith.constant dense<0.000000e+00> : vector<64x128xf32>
    %13 = tpu.matmul %5, %12, %cst_6 {dimension_numbers = #tpu.dot_dimension_numbers<[1], [0], [0], [1], [0, 0, 1, 1], [], []>} : vector<64x32xbf16>, vector<32x128xbf16>, vector<64x128xf32> -> vector<64x128xf32>
    %14 = arith.negf %13 : vector<64x128xf32>
    %15 = math.exp %14 : vector<64x128xf32>
    %cst_7 = arith.constant 1.000000e+00 : f32
    %16 = vector.broadcast %cst_7 : f32 to vector<64x128xf32>
    %17 = arith.addf %16, %15 : vector<64x128xf32>
    %18 = arith.divf %16, %17 : vector<64x128xf32>
    %c0_8 = arith.constant 0 : index
    %c0_9 = arith.constant 0 : index
    %19 = vector.load %arg4[%c0_8, %c0_9] : memref<64x1xf32, #tpu.memory_space<vmem>>, vector<64x1xf32>
    %20 = vector.broadcast %19 : vector<64x1xf32> to vector<64x128xf32>
    %21 = arith.mulf %20, %18 : vector<64x128xf32>
    %cst_10 = arith.constant dense<0.000000e+00> : vector<128xf32>
    %22 = vector.multi_reduction <add>, %21, %cst_10 [0] : vector<64x128xf32> to vector<128xf32>
    %23 = vector.shape_cast %22 : vector<128xf32> to vector<1x128xf32>
    %c0_11 = arith.constant 0 : index
    %c0_12 = arith.constant 0 : index
    %24 = vector.load %arg5[%c0_11, %c0_12] : memref<1x128xf32, #tpu.memory_space<vmem>>, vector<1x128xf32>
    tpu.vector_store %arg5[%c0_11, %c0_12], %23 {strides = array<i32>} : memref<1x128xf32, #tpu.memory_space<vmem>>, vector<1x128xf32>,
    return
  }
  func.func @transform_0(%arg0: i32) -> (i32, i32) {
    %c0_i32 = arith.constant 0 : i32
    %c0_i32_0 = arith.constant 0 : i32
    return %c0_i32, %arg0 : i32, i32
  }
  func.func @transform_1(%arg0: i32) -> (i32, i32) {
    %c0_i32 = arith.constant 0 : i32
    %c0_i32_0 = arith.constant 0 : i32
    %c0_i32_1 = arith.constant 0 : i32
    return %c0_i32, %c0_i32_0 : i32, i32
  }
  func.func @transform_2(%arg0: i32) -> (i32, i32) {
    %c0_i32 = arith.constant 0 : i32
    %c0_i32_0 = arith.constant 0 : i32
    %c0_i32_1 = arith.constant 0 : i32
    return %c0_i32, %c0_i32_0 : i32, i32
  }
  func.func @transform_3(%arg0: i32) -> (i32, i32) {
    %c0_i32 = arith.constant 0 : i32
    %c0_i32_0 = arith.constant 0 : i32
    %c0_i32_1 = arith.constant 0 : i32
    return %c0_i32, %c0_i32_0 : i32, i32
  }
  func.func @transform_4(%arg0: i32) -> (i32, i32) {
    %c0_i32 = arith.constant 0 : i32
    %c0_i32_0 = arith.constant 0 : i32
    return %c0_i32, %arg0 : i32, i32
  }
}

</mosaic_0001>

<llo_original>
// kernel: tpu_custom_call.1
$region0: #{tpu_custom_call.1}
  #allocation0 [shape = 'u32[]', space=smem, size = 0x4, offset = 0x4, fixed_abs, tag = 'smem constant byte address 0x4 - core index']
  #allocation1 [shape = 'u32[72,128]{1,0:T(1,128)}', space=vmem, size = 0x9000, scoped, tag = 'internal scratch']
  %s0 = inlined_call_operand.vmem [shape: f32[16,128], index: 0, kind: input, shape index: {}]
  %s1 = inlined_call_operand.vmem [shape: f32[32,16], index: 1, kind: input, shape index: {}]
  %s2 = inlined_call_operand.vmem [shape: f32[64,32], index: 2, kind: input, shape index: {}]
  %s3 = inlined_call_operand.vmem [shape: f32[64,1], index: 3, kind: input, shape index: {}]
  %s4 = inlined_call_operand.hbm [shape: f32[1,128], index: 4, kind: output, shape index: {}]
  %s5 = sld [smem:[#allocation0]]
  $region26: #{tpu_custom_call.1} parent=0
    _
  %s7 = ssub.s32 1, %s5
  %s8 = scalar_select 0, %s7, %s5
  $region1: #{tpu_custom_call.1} parent=0
    #allocation2 [shape = 'u8[512]{0}', space=vmem, size = 0x400, scoped, tag = 'output window, operand 0, single buffered']
    #allocation3 [shape = 's32[1]{0}', space=sflag, size = 0x4, scoped, tag = 'scoped memory for tpu_custom_call.1']
    %9 = vsyncpa [#allocation3], 0
    // Predicated region
    $region2: #{tpu_custom_call.1} parent=1 // pred_check
      _
    $region3: #{tpu_custom_call.1} parent=1 // pred_check_branch
      %11 = sbr.rel (0) target = $region5
    $region4: #{tpu_custom_call.1} parent=1 // pred_region
      _
    $region5: #{tpu_custom_call.1} parent=1 // pred_fallthru
      _
    // Predicated region
    $region6: #{tpu_custom_call.1} parent=1 // pred_check
      _
    $region7: #{tpu_custom_call.1} parent=1 // pred_check_branch
      %13 = sbr.rel (0) target = $region9
    $region8: #{tpu_custom_call.1} parent=1 // pred_region
      _
    $region9: #{tpu_custom_call.1} parent=1 // pred_fallthru
      _
    // Predicated region
    $region10: #{tpu_custom_call.1} parent=1 // pred_check
      _
    $region11: #{tpu_custom_call.1} parent=1 // pred_check_branch
      %15 = sbr.rel (0) target = $region13
    $region12: #{tpu_custom_call.1} parent=1 // pred_region
      _
    $region13: #{tpu_custom_call.1} parent=1 // pred_fallthru
      _
    // Predicated region
    $region14: #{tpu_custom_call.1} parent=1 // pred_check
      _
    $region15: #{tpu_custom_call.1} parent=1 // pred_check_branch
      %17 = sbr.rel (0) target = $region17
    $region16: #{tpu_custom_call.1} parent=1 // pred_region
      _
    $region17: #{tpu_custom_call.1} parent=1 // pred_fallthru
      _
    %v19 = vld [vmem:[%s0] sm:$0xff]
    %v20 = vld [vmem:[%s0 + $0x8] sm:$0xff]
    %v21 = vpack.c.bf16 %v20, %v19
    %v22 = vld [vmem:[%s1] sm:$0xff]
    %v23 = vld [vmem:[%s1 + $0x8] sm:$0xff]
    %v24 = vld [vmem:[%s1 + $0x10] sm:$0xff]
    %v25 = vld [vmem:[%s1 + $0x18] sm:$0xff]
    %v26 = vpack.c.bf16 %v23, %v22
    %v27 = vpack.c.bf16 %v25, %v24
    %v28 = vld [vmem:[%s2] sm:$0xff]
    %v29 = vld [vmem:[%s2 + $0x8] sm:$0xff]
    %v30 = vld [vmem:[%s2 + $0x10] sm:$0xff]
    %v31 = vld [vmem:[%s2 + $0x18] sm:$0xff]
    %v32 = vld [vmem:[%s2 + $0x20] sm:$0xff]
    %v33 = vld [vmem:[%s2 + $0x28] sm:$0xff]
    %v34 = vld [vmem:[%s2 + $0x30] sm:$0xff]
    %v35 = vld [vmem:[%s2 + $0x38] sm:$0xff]
    %v36 = vpack.c.bf16 %v29, %v28
    %v37 = vpack.c.bf16 %v31, %v30
    %v38 = vpack.c.bf16 %v33, %v32
    %v39 = vpack.c.bf16 %v35, %v34
    %vm40 = vcmask 130048
    %v42 = vsel %vm40, %v26, 0
    %v45 = vsel %vm40, %v27, 0
    %47 = vmatpush.bf16.msra.mxu0 0
    %48 = vmatpush.bf16.msra.mxu0 0
    %49 = vmatpush.bf16.msra.mxu0 0
    %50 = vmatpush.bf16.msra.mxu0 0
    %51 = vmatpush.bf16.msra.mxu0 0
    %52 = vmatpush.bf16.msra.mxu0 0
    %53 = vmatpush.bf16.msra.mxu0 0
    %54 = vmatpush.bf16.msra.mxu0 %v21
    %55 = vmatmul.bf16.gmra.mxu0 %v42
    %v56 = vpop.f32.mrf.mxu0
    %v57 = vadd.f32 0.0, %v56
    %v58 = vpop.f32.mrf.mxu0
    %v59 = vadd.f32 0.0, %v58
    %60 = vmatmul.bf16.gmra.mxu0 %v45
    %v61 = vpop.f32.mrf.mxu0
    %v62 = vadd.f32 0.0, %v61
    %v63 = vpop.f32.mrf.mxu0
    %v64 = vadd.f32 0.0, %v63
    %65 = vdwg.mxu0
    %v66 = vxor.u32 %v57, 2147483648
    %v67 = vxor.u32 %v59, 2147483648
    %v68 = vxor.u32 %v62, 2147483648
    %v69 = vxor.u32 %v64, 2147483648
    %v70 = vmul.f32 %v66, 1.442695
    %v71 = vpow.pop %v70
    %v72 = vmul.f32 %v67, 1.442695
    %v73 = vpow.pop %v72
    %v74 = vmul.f32 %v68, 1.442695
    %v75 = vpow.pop %v74
    %v76 = vmul.f32 %v69, 1.442695
    %v77 = vpow.pop %v76
    %v78 = vadd.f32 %v71, 1.0
    %v79 = vadd.f32 %v73, 1.0
    %v80 = vadd.f32 %v75, 1.0
    %v81 = vadd.f32 %v77, 1.0
    %v82 = vrcp.pop %v78
    %v83 = vmul.f32 %v78, %v82
    %v84 = vsub.f32 1.0, %v83
    %v85 = vmul.f32 %v82, %v84
    %v86 = vadd.f32 %v82, %v85
    %vm87 = vweird.f32 %v78
    %vm88 = vweird.f32 %v82
    %vm89 = vmor %vm87, %vm88
    %v90 = vsel %vm89, %v82, %v86
    %v91 = vand.u32 2147483647, %v78
    %vm92 = vcmp.eq.f32.partialorder %v91, 8.507059e+37
    %v93 = vand.u32 %v78, 2147483648
    %v94 = vor.u32 1.1754944e-38, %v93
    %v95 = vsel %vm92, %v94, %v90
    %v96 = vmul.f32 1.0, %v95
    %v97 = vrcp.pop %v79
    %v98 = vmul.f32 %v79, %v97
    %v99 = vsub.f32 1.0, %v98
    %v100 = vmul.f32 %v97, %v99
    %v101 = vadd.f32 %v97, %v100
    %vm102 = vweird.f32 %v79
    %vm103 = vweird.f32 %v97
    %vm104 = vmor %vm102, %vm103
    %v105 = vsel %vm104, %v97, %v101
    %v106 = vand.u32 2147483647, %v79
    %vm107 = vcmp.eq.f32.partialorder %v106, 8.507059e+37
    %v108 = vand.u32 %v79, 2147483648
    %v109 = vor.u32 1.1754944e-38, %v108
    %v110 = vsel %vm107, %v109, %v105
    %v111 = vmul.f32 1.0, %v110
    %v112 = vrcp.pop %v80
    %v113 = vmul.f32 %v80, %v112
    %v114 = vsub.f32 1.0, %v113
    %v115 = vmul.f32 %v112, %v114
    %v116 = vadd.f32 %v112, %v115
    %vm117 = vweird.f32 %v80
    %vm118 = vweird.f32 %v112
    %vm119 = vmor %vm117, %vm118
    %v120 = vsel %vm119, %v112, %v116
    %v121 = vand.u32 2147483647, %v80
    %vm122 = vcmp.eq.f32.partialorder %v121, 8.507059e+37
    %v123 = vand.u32 %v80, 2147483648
    %v124 = vor.u32 1.1754944e-38, %v123
    %v125 = vsel %vm122, %v124, %v120
    %v126 = vmul.f32 1.0, %v125
    %v127 = vrcp.pop %v81
    %v128 = vmul.f32 %v81, %v127
    %v129 = vsub.f32 1.0, %v128
    %v130 = vmul.f32 %v127, %v129
    %v131 = vadd.f32 %v127, %v130
    %vm132 = vweird.f32 %v81
    %vm133 = vweird.f32 %v127
    %vm134 = vmor %vm132, %vm133
    %v135 = vsel %vm134, %v127, %v131
    %v136 = vand.u32 2147483647, %v81
    %vm137 = vcmp.eq.f32.partialorder %v136, 8.507059e+37
    %v138 = vand.u32 %v81, 2147483648
    %v139 = vor.u32 1.1754944e-38, %v138
    %v140 = vsel %vm137, %v139, %v135
    %v141 = vmul.f32 1.0, %v140
    %v142 = vpack.c.bf16 %v111, %v96
    %v143 = vpack.c.bf16 %v141, %v126
    %vm144 = vcmask 261120
    %v146 = vsel %vm144, %v36, 0
    %v149 = vsel %vm144, %v37, 0
    %v152 = vsel %vm144, %v38, 0
    %v155 = vsel %vm144, %v39, 0
    %157 = vmatpush.bf16.msra.mxu0 0
    %158 = vmatpush.bf16.msra.mxu0 0
    %159 = vmatpush.bf16.msra.mxu0 0
    %160 = vmatpush.bf16.msra.mxu0 0
    %161 = vmatpush.bf16.msra.mxu0 0
    %162 = vmatpush.bf16.msra.mxu0 0
    %163 = vmatpush.bf16.msra.mxu0 %v143
    %164 = vmatpush.bf16.msra.mxu0 %v142
    %165 = vmatmul.bf16.gmra.mxu0 %v146
    %v166 = vpop.f32.mrf.mxu0
    %v167 = vadd.f32 0.0, %v166
    %v168 = vpop.f32.mrf.mxu0
    %v169 = vadd.f32 0.0, %v168
    %170 = vmatmul.bf16.gmra.mxu0 %v149
    %v171 = vpop.f32.mrf.mxu0
    %v172 = vadd.f32 0.0, %v171
    %v173 = vpop.f32.mrf.mxu0
    %v174 = vadd.f32 0.0, %v173
    %175 = vmatmul.bf16.gmra.mxu0 %v152
    %v176 = vpop.f32.mrf.mxu0
    %v177 = vadd.f32 0.0, %v176
    %v178 = vpop.f32.mrf.mxu0
    %v179 = vadd.f32 0.0, %v178
    %180 = vmatmul.bf16.gmra.mxu0 %v155
    %v181 = vpop.f32.mrf.mxu0
    %v182 = vadd.f32 0.0, %v181
    %v183 = vpop.f32.mrf.mxu0
    %v184 = vadd.f32 0.0, %v183
    %185 = vdwg.mxu0
    %v186 = vxor.u32 %v167, 2147483648
    %v187 = vxor.u32 %v169, 2147483648
    %v188 = vxor.u32 %v172, 2147483648
    %v189 = vxor.u32 %v174, 2147483648
    %v190 = vxor.u32 %v177, 2147483648
    %v191 = vxor.u32 %v179, 2147483648
    %v192 = vxor.u32 %v182, 2147483648
    %v193 = vxor.u32 %v184, 2147483648
    %v194 = vmul.f32 %v186, 1.442695
    %v195 = vpow.pop %v194
    %v196 = vmul.f32 %v187, 1.442695
    %v197 = vpow.pop %v196
    %v198 = vmul.f32 %v188, 1.442695
    %v199 = vpow.pop %v198
    %v200 = vmul.f32 %v189, 1.442695
    %v201 = vpow.pop %v200
    %v202 = vmul.f32 %v190, 1.442695
    %v203 = vpow.pop %v202
    %v204 = vmul.f32 %v191, 1.442695
    %v205 = vpow.pop %v204
    %v206 = vmul.f32 %v192, 1.442695
    %v207 = vpow.pop %v206
    %v208 = vmul.f32 %v193, 1.442695
    %v209 = vpow.pop %v208
    %v210 = vadd.f32 %v195, 1.0
    %v211 = vadd.f32 %v197, 1.0
    %v212 = vadd.f32 %v199, 1.0
    %v213 = vadd.f32 %v201, 1.0
    %v214 = vadd.f32 %v203, 1.0
    %v215 = vadd.f32 %v205, 1.0
    %v216 = vadd.f32 %v207, 1.0
    %v217 = vadd.f32 %v209, 1.0
    %v218 = vrcp.pop %v210
    %v219 = vmul.f32 %v210, %v218
    %v220 = vsub.f32 1.0, %v219
    %v221 = vmul.f32 %v218, %v220
    %v222 = vadd.f32 %v218, %v221
    %vm223 = vweird.f32 %v210
    %vm224 = vweird.f32 %v218
    %vm225 = vmor %vm223, %vm224
    %v226 = vsel %vm225, %v218, %v222
    %v227 = vand.u32 2147483647, %v210
    %vm228 = vcmp.eq.f32.partialorder %v227, 8.507059e+37
    %v229 = vand.u32 %v210, 2147483648
    %v230 = vor.u32 1.1754944e-38, %v229
    %v231 = vsel %vm228, %v230, %v226
    %v232 = vmul.f32 1.0, %v231
    %v233 = vrcp.pop %v211
    %v234 = vmul.f32 %v211, %v233
    %v235 = vsub.f32 1.0, %v234
    %v236 = vmul.f32 %v233, %v235
    %v237 = vadd.f32 %v233, %v236
    %vm238 = vweird.f32 %v211
    %vm239 = vweird.f32 %v233
    %vm240 = vmor %vm238, %vm239
    %v241 = vsel %vm240, %v233, %v237
    %v242 = vand.u32 2147483647, %v211
    %vm243 = vcmp.eq.f32.partialorder %v242, 8.507059e+37
    %v244 = vand.u32 %v211, 2147483648
    %v245 = vor.u32 1.1754944e-38, %v244
    %v246 = vsel %vm243, %v245, %v241
    %v247 = vmul.f32 1.0, %v246
    %v248 = vrcp.pop %v212
    %v249 = vmul.f32 %v212, %v248
    %v250 = vsub.f32 1.0, %v249
    %v251 = vmul.f32 %v248, %v250
    %v252 = vadd.f32 %v248, %v251
    %vm253 = vweird.f32 %v212
    %vm254 = vweird.f32 %v248
    %vm255 = vmor %vm253, %vm254
    %v256 = vsel %vm255, %v248, %v252
    %v257 = vand.u32 2147483647, %v212
    %vm258 = vcmp.eq.f32.partialorder %v257, 8.507059e+37
    %v259 = vand.u32 %v212, 2147483648
    %v260 = vor.u32 1.1754944e-38, %v259
    %v261 = vsel %vm258, %v260, %v256
    %v262 = vmul.f32 1.0, %v261
    %v263 = vrcp.pop %v213
    %v264 = vmul.f32 %v213, %v263
    %v265 = vsub.f32 1.0, %v264
    %v266 = vmul.f32 %v263, %v265
    %v267 = vadd.f32 %v263, %v266
    %vm268 = vweird.f32 %v213
    %vm269 = vweird.f32 %v263
    %vm270 = vmor %vm268, %vm269
    %v271 = vsel %vm270, %v263, %v267
    %v272 = vand.u32 2147483647, %v213
    %vm273 = vcmp.eq.f32.partialorder %v272, 8.507059e+37
    %v274 = vand.u32 %v213, 2147483648
    %v275 = vor.u32 1.1754944e-38, %v274
    %v276 = vsel %vm273, %v275, %v271
    %v277 = vmul.f32 1.0, %v276
    %v278 = vrcp.pop %v214
    %v279 = vmul.f32 %v214, %v278
    %v280 = vsub.f32 1.0, %v279
    %v281 = vmul.f32 %v278, %v280
    %v282 = vadd.f32 %v278, %v281
    %vm283 = vweird.f32 %v214
    %vm284 = vweird.f32 %v278
    %vm285 = vmor %vm283, %vm284
    %v286 = vsel %vm285, %v278, %v282
    %v287 = vand.u32 2147483647, %v214
    %vm288 = vcmp.eq.f32.partialorder %v287, 8.507059e+37
    %v289 = vand.u32 %v214, 2147483648
    %v290 = vor.u32 1.1754944e-38, %v289
    %v291 = vsel %vm288, %v290, %v286
    %v292 = vmul.f32 1.0, %v291
    %v293 = vrcp.pop %v215
    %v294 = vmul.f32 %v215, %v293
    %v295 = vsub.f32 1.0, %v294
    %v296 = vmul.f32 %v293, %v295
    %v297 = vadd.f32 %v293, %v296
    %vm298 = vweird.f32 %v215
    %vm299 = vweird.f32 %v293
    %vm300 = vmor %vm298, %vm299
    %v301 = vsel %vm300, %v293, %v297
    %v302 = vand.u32 2147483647, %v215
    %vm303 = vcmp.eq.f32.partialorder %v302, 8.507059e+37
    %v304 = vand.u32 %v215, 2147483648
    %v305 = vor.u32 1.1754944e-38, %v304
    %v306 = vsel %vm303, %v305, %v301
    %v307 = vmul.f32 1.0, %v306
    %v308 = vrcp.pop %v216
    %v309 = vmul.f32 %v216, %v308
    %v310 = vsub.f32 1.0, %v309
    %v311 = vmul.f32 %v308, %v310
    %v312 = vadd.f32 %v308, %v311
    %vm313 = vweird.f32 %v216
    %vm314 = vweird.f32 %v308
    %vm315 = vmor %vm313, %vm314
    %v316 = vsel %vm315, %v308, %v312
    %v317 = vand.u32 2147483647, %v216
    %vm318 = vcmp.eq.f32.partialorder %v317, 8.507059e+37
    %v319 = vand.u32 %v216, 2147483648
    %v320 = vor.u32 1.1754944e-38, %v319
    %v321 = vsel %vm318, %v320, %v316
    %v322 = vmul.f32 1.0, %v321
    %v323 = vrcp.pop %v217
    %v324 = vmul.f32 %v217, %v323
    %v325 = vsub.f32 1.0, %v324
    %v326 = vmul.f32 %v323, %v325
    %v327 = vadd.f32 %v323, %v326
    %vm328 = vweird.f32 %v217
    %vm329 = vweird.f32 %v323
    %vm330 = vmor %vm328, %vm329
    %v331 = vsel %vm330, %v323, %v327
    %v332 = vand.u32 2147483647, %v217
    %vm333 = vcmp.eq.f32.partialorder %v332, 8.507059e+37
    %v334 = vand.u32 %v217, 2147483648
    %v335 = vor.u32 1.1754944e-38, %v334
    %v336 = vsel %vm333, %v335, %v331
    %v337 = vmul.f32 1.0, %v336
    %v338 = vld [vmem:[%s3] sm:$0xff]
    %v339 = vld [vmem:[%s3 + $0x8] sm:$0xff]
    %v340 = vld [vmem:[%s3 + $0x10] sm:$0xff]
    %v341 = vld [vmem:[%s3 + $0x18] sm:$0xff]
    %v342 = vld [vmem:[%s3 + $0x20] sm:$0xff]
    %v343 = vld [vmem:[%s3 + $0x28] sm:$0xff]
    %v344 = vld [vmem:[%s3 + $0x30] sm:$0xff]
    %v345 = vld [vmem:[%s3 + $0x38] sm:$0xff]
    %347 = vset.pattern.permute.xlu0 0
    %348 = vperm.xlu0 %347, %v338
    %v349 = vpop.permute.xlu0 %348
    %352 = vset.pattern.permute.xlu0 0
    %353 = vperm.xlu0 %352, %v339
    %v354 = vpop.permute.xlu0 %353
    %357 = vset.pattern.permute.xlu0 0
    %358 = vperm.xlu0 %357, %v340
    %v359 = vpop.permute.xlu0 %358
    %362 = vset.pattern.permute.xlu0 0
    %363 = vperm.xlu0 %362, %v341
    %v364 = vpop.permute.xlu0 %363
    %367 = vset.pattern.permute.xlu0 0
    %368 = vperm.xlu0 %367, %v342
    %v369 = vpop.permute.xlu0 %368
    %372 = vset.pattern.permute.xlu0 0
    %373 = vperm.xlu0 %372, %v343
    %v374 = vpop.permute.xlu0 %373
    %377 = vset.pattern.permute.xlu0 0
    %378 = vperm.xlu0 %377, %v344
    %v379 = vpop.permute.xlu0 %378
    %382 = vset.pattern.permute.xlu0 0
    %383 = vperm.xlu0 %382, %v345
    %v384 = vpop.permute.xlu0 %383
    %v386 = vmul.f32 %v349, %v232
    %v387 = vmul.f32 %v354, %v247
    %v388 = vmul.f32 %v359, %v262
    %v389 = vmul.f32 %v364, %v277
    %v390 = vmul.f32 %v369, %v292
    %v391 = vmul.f32 %v374, %v307
    %v392 = vmul.f32 %v379, %v322
    %v393 = vmul.f32 %v384, %v337
    %v394 = vadd.f32 %v386, %v387
    %v395 = vadd.f32 %v394, %v388
    %v396 = vadd.f32 %v395, %v389
    %v397 = vadd.f32 %v396, %v390
    %v398 = vadd.f32 %v397, %v391
    %v399 = vadd.f32 %v398, %v392
    %v400 = vadd.f32 %v399, %v393
    %v401 = vrot.slane %v400, 4
    %v402 = vadd.f32 %v400, %v401
    %v403 = vrot.slane %v402, 2
    %v404 = vadd.f32 %v402, %v403
    %v405 = vrot.slane %v404, 1
    %v406 = vadd.f32 %v404, %v405
    %407 = vst [vmem:[#allocation2] sm:$0x1] %v406
    // Predicated region
    $region18: #{tpu_custom_call.1} parent=1 // pred_check
      _
    $region19: #{tpu_custom_call.1} parent=1 // pred_check_branch
      %409 = sbr.rel (0) target = $region21
    $region20: #{tpu_custom_call.1} parent=1 // pred_region
      %411 = vsyncadd [#allocation3], 0
      %s413 = sshll.u32 [#allocation2], 4
      %s414 = int_to_ptr.vmem [resolvable:$true] %s413
      %s415 = sshll.u32 %s4, 4
      %s416 = int_to_ptr.hbm [resolvable:$true] %s415
      %418 = dma.vmem_to_hbm [thread:$0]  %s414, 16, %s416, [#allocation3]
    $region21: #{tpu_custom_call.1} parent=1 // pred_fallthru
      _
    // Predicated region
    $region22: #{tpu_custom_call.1} parent=1 // pred_check
      _
    $region23: #{tpu_custom_call.1} parent=1 // pred_check_branch
      %420 = sbr.rel (0) target = $region25
    $region24: #{tpu_custom_call.1} parent=1 // pred_region
      %422 = dma.done [#allocation3], 16
    $region25: #{tpu_custom_call.1} parent=1 // pred_fallthru
      _
    %423 = vsyncpa [#allocation3], 1

</llo_original>
